<compile_context>
chip_gen: v7x
topology: tpu7x:2x2x1
jax: 0.10.0
libtpu: 0.0.40
codegen_flags: <defaults>
</compile_context>

<pallas_src>
import numpy as np
import jax
import jax.numpy as jnp
from jax.experimental import pallas as pl
from jax.experimental.pallas import tpu as pltpu

KERNEL = 2
STRIDE = 3
PAD = 1
H = W = 30                      # spatial size forced by fold(output_size=(30,30))
HW = H * W                      # 900
PLANES_PER_WIDE_ROW = 32        # 32 * 900 = 28800 = lcm(900, 128)
WIDE_LANES = PLANES_PER_WIDE_ROW * HW

# Per-block row targets (~7-8 MiB per buffer; in+out double-buffered ~= 32 MiB).
MAX_ROWS_WIDE = 64              # 64 * 28800 * 4 B        ~= 7.0 MiB / block
MAX_ROWS_NARROW = 2048          # 2048 * 1024(pad) * 4 B  ~= 8.0 MiB / block in VMEM
VMEM_LIMIT_BYTES = 40 << 20     # above v5e 16 MiB / v6e,v7x 32 MiB scoped defaults


def _coverage_mask_row(dtype) -> np.ndarray:
    """(1, HW) mask: 1 where fold(unfold(x)) keeps the pixel, else 0."""
    rows = ((np.arange(H) + PAD) % STRIDE) < KERNEL
    cols = ((np.arange(W) + PAD) % STRIDE) < KERNEL
    return np.logical_and(rows[:, None], cols[None, :]).reshape(1, HW).astype(dtype)


def _round_up(x: int, m: int) -> int:
    return ((x + m - 1) // m) * m


def _choose_tile_rows(rows: int, max_rows: int) -> int:
    """Sublane-aligned tile giving an even (>=2) number of grid steps when possible."""
    if rows <= 8:
        return rows                                   # single full-dim block (legal)
    steps = max(2, _round_up(pl.cdiv(rows, max_rows), 2))
    return _round_up(pl.cdiv(rows, steps), 8)


def _unfold_fold_kernel(mask_ref, x_ref, o_ref):
    # mask_ref: (1, L) constant tile, sublane-broadcast against the (tile, L) block.
    # x_ref / o_ref: (tile_rows, L)
    x = x_ref[...]
    o_ref[...] = jnp.where(mask_ref[...] != 0, x, jnp.zeros_like(x))


def _launch(x2d: jax.Array, mask_row: jax.Array, tile_rows: int) -> jax.Array:
    rows, lanes = x2d.shape
    grid = (pl.cdiv(rows, tile_rows),)
    return pl.pallas_call(
        _unfold_fold_kernel,
        out_shape=jax.ShapeDtypeStruct((rows, lanes), x2d.dtype),
        grid=grid,
        in_specs=[
            pl.BlockSpec((1, lanes), lambda i: (0, 0)),          # mask (constant tile)
            pl.BlockSpec((tile_rows, lanes), lambda i: (i, 0)),  # x
        ],
        out_specs=pl.BlockSpec((tile_rows, lanes), lambda i: (i, 0)),
        compiler_params=pltpu.CompilerParams(
            dimension_semantics=("parallel",),
            vmem_limit_bytes=VMEM_LIMIT_BYTES,
        ),
    )(mask_row, x2d)


def unfold_fold(x: jax.Array) -> jax.Array:
    """Pallas implementation of fold(unfold(x)) with k=2, s=3, p=1, out=(30,30)."""
    n, c, h, w = x.shape
    assert (h, w) == (H, W), "input spatial size is forced by fold(output_size=(30,30))"
    nc = n * c
    mask900 = _coverage_mask_row(np.dtype(x.dtype))

    if nc % PLANES_PER_WIDE_ROW == 0:
        # 128-multiple lane layout: (nc/32, 28800).  Pure view, no extra copy.
        rows = nc // PLANES_PER_WIDE_ROW
        x2d = x.reshape(rows, WIDE_LANES)
        mask_row = jnp.asarray(np.tile(mask900, (1, PLANES_PER_WIDE_ROW)))
        tile_rows = _choose_tile_rows(rows, MAX_ROWS_WIDE)
    else:
        # Fallback: one lane-dense 900-wide row per (n, c) plane.
        rows = nc
        x2d = x.reshape(rows, HW)
        mask_row = jnp.asarray(mask900)
        tile_rows = _choose_tile_rows(rows, MAX_ROWS_NARROW)

    out = _launch(x2d, mask_row, tile_rows)
    return out.reshape(n, c, h, w)


def _reference(x: jax.Array) -> jax.Array:
    """Pure-JAX literal unfold -> fold reference (patch extract + scatter-add)."""
    xp = jnp.pad(x, ((0, 0), (0, 0), (PAD, PAD), (PAD, PAD)))
    out_p = jnp.zeros_like(xp)
    for di in range(KERNEL):
        for dj in range(KERNEL):
            patch = xp[:, :, di::STRIDE, dj::STRIDE]            # (N, C, 11, 11)
            out_p = out_p.at[:, :, di::STRIDE, dj::STRIDE].add(patch)
    return out_p[:, :, PAD:PAD + H, PAD:PAD + W]


if __name__ == "__main__":
    k1, k2 = jax.random.split(jax.random.PRNGKey(0))

    # Module-implied small shape (nc = 8 -> lane-dense 900-wide fallback path).
    x = jax.random.normal(k1, (2, 4, H, W), dtype=jnp.float32)
    y = jax.block_until_ready(unfold_fold(x))
    assert y.shape == (2, 4, H, W) and y.dtype == jnp.float32
    if not jnp.allclose(y, _reference(x), atol=1e-6, rtol=1e-6):
        raise AssertionError("Pallas kernel does not match unfold/fold reference (narrow path)")

    # nc = 32 -> exercises the 128-multiple-lane (rows, 28800) layout.
    x_wide = jax.random.normal(k2, (2, 16, H, W), dtype=jnp.float32)
    y_wide = jax.block_until_ready(unfold_fold(x_wide))
    if not jnp.allclose(y_wide, _reference(x_wide), atol=1e-6, rtol=1e-6):
        raise AssertionError("Pallas kernel does not match unfold/fold reference (wide path)")

    print("KERNEL_OK")
</pallas_src>

<mosaic_0001>
module attributes {stable_mosaic.version = 11 : i64} {
  func.func @_unfold_fold_kernel(%arg0: i32, %arg1: memref<1x900xf32, #tpu.memory_space<vmem>>, %arg2: memref<8x900xf32, #tpu.memory_space<vmem>>, %arg3: memref<8x900xf32, #tpu.memory_space<vmem>>) attributes {dimension_semantics = [#tpu.dimension_semantics<parallel>], iteration_bounds = array<i64: 1>, scalar_prefetch = 0 : i64, scratch_operands = 0 : i64, tpu.core_type = #tpu.core_type<tc>, window_params = [{pipeline_mode = #tpu.pipeline_mode<synchronous>, transform_indices = @transform_0, window_bounds = array<i64: 1, 900>}, {transform_indices = @transform_1, window_bounds = array<i64: 8, 900>}, {transform_indices = @transform_2, window_bounds = array<i64: 8, 900>}]} {
    %c0 = arith.constant 0 : index
    %c0_0 = arith.constant 0 : index
    %0 = vector.load %arg2[%c0, %c0_0] : memref<8x900xf32, #tpu.memory_space<vmem>>, vector<8x900xf32>
    %c0_1 = arith.constant 0 : index
    %c0_2 = arith.constant 0 : index
    %1 = vector.load %arg1[%c0_1, %c0_2] : memref<1x900xf32, #tpu.memory_space<vmem>>, vector<1x900xf32>
    %cst = arith.constant 0.000000e+00 : f32
    %2 = vector.broadcast %cst : f32 to vector<1x900xf32>
    %3 = arith.cmpf one, %1, %2 : vector<1x900xf32>
    %cst_3 = arith.constant 0.000000e+00 : f32
    %4 = vector.broadcast %cst_3 : f32 to vector<8x900xf32>
    %5 = vector.shape_cast %3 : vector<1x900xi1> to vector<1x900xi1>
    %6 = vector.broadcast %5 : vector<1x900xi1> to vector<8x900xi1>
    %7 = arith.select %6, %0, %4 : vector<8x900xi1>, vector<8x900xf32>
    %c0_4 = arith.constant 0 : index
    %c0_5 = arith.constant 0 : index
    %8 = vector.load %arg3[%c0_4, %c0_5] : memref<8x900xf32, #tpu.memory_space<vmem>>, vector<8x900xf32>
    tpu.vector_store %arg3[%c0_4, %c0_5], %7 {strides = array<i32>} : memref<8x900xf32, #tpu.memory_space<vmem>>, vector<8x900xf32>,
    return
  }
  func.func @transform_0(%arg0: i32) -> (i32, i32) {
    %c0_i32 = arith.constant 0 : i32
    %c0_i32_0 = arith.constant 0 : i32
    %c0_i32_1 = arith.constant 0 : i32
    return %c0_i32, %c0_i32_0 : i32, i32
  }
  func.func @transform_1(%arg0: i32) -> (i32, i32) {
    %c0_i32 = arith.constant 0 : i32
    %c0_i32_0 = arith.constant 0 : i32
    return %arg0, %c0_i32 : i32, i32
  }
  func.func @transform_2(%arg0: i32) -> (i32, i32) {
    %c0_i32 = arith.constant 0 : i32
    %c0_i32_0 = arith.constant 0 : i32
    return %arg0, %c0_i32 : i32, i32
  }
}

</mosaic_0001>

<llo_original>
// kernel: tpu_custom_call.1
$region0: #{tpu_custom_call.1}
  #allocation0 [shape = 'u32[]', space=smem, size = 0x4, offset = 0x4, fixed_abs, tag = 'smem constant byte address 0x4 - core index']
  #allocation1 [shape = 'u32[144,128]{1,0:T(1,128)}', space=vmem, size = 0x12000, scoped, tag = 'internal scratch']
  %s0 = inlined_call_operand.hbm [shape: f32[1,900], index: 0, kind: input, shape index: {}]
  %s1 = inlined_call_operand.hbm [shape: f32[8,900], index: 1, kind: input, shape index: {}]
  %s2 = inlined_call_operand.hbm [shape: f32[8,900], index: 2, kind: output, shape index: {}]
  %s3 = sld [smem:[#allocation0]]
  $region26: #{tpu_custom_call.1} parent=0
    _
  %s5 = ssub.s32 1, %s3
  %s6 = scalar_select 0, %s5, %s3
  $region1: #{tpu_custom_call.1} parent=0
    #allocation2 [shape = 'u8[4096]{0}', space=vmem, size = 0x1000, scoped, tag = 'input window, operand 0, single buffered']
    #allocation3 [shape = 's32[1]{0}', space=sflag, size = 0x4, scoped, tag = 'scoped memory for tpu_custom_call.1']
    #allocation4 [shape = 's32[1]{0}', space=sflag, size = 0x4, scoped, tag = 'scoped memory for tpu_custom_call.1']
    #allocation5 [shape = 'u8[32768]{0}', space=vmem, size = 0x8000, scoped, tag = 'input window, operand 1, single buffered']
    #allocation6 [shape = 's32[1]{0}', space=sflag, size = 0x4, scoped, tag = 'scoped memory for tpu_custom_call.1']
    #allocation7 [shape = 'u8[32768]{0}', space=vmem, size = 0x8000, scoped, tag = 'output window, operand 0, single buffered']
    %7 = vsyncpa [#allocation3], 0
    %8 = vsyncpa [#allocation6], 0
    %9 = vsyncpa [#allocation4], 0
    // Predicated region
    $region2: #{tpu_custom_call.1} parent=1 // pred_check
      _
    $region3: #{tpu_custom_call.1} parent=1 // pred_check_branch
      %11 = sbr.rel (0) target = $region5
    $region4: #{tpu_custom_call.1} parent=1 // pred_region
      %s13 = ssub.s32 128, 128
      %14 = vsyncadd [#allocation3], %s13
      %s16 = sshll.u32 [#allocation2], 4
      %s17 = int_to_ptr.vmem [resolvable:$true] %s16
      %19 = dma.hbm_to_vmem [thread:$0]  %s0, 128, %s17, [#allocation3]
    $region5: #{tpu_custom_call.1} parent=1 // pred_fallthru
      _
    // Predicated region
    $region6: #{tpu_custom_call.1} parent=1 // pred_check
      _
    $region7: #{tpu_custom_call.1} parent=1 // pred_check_branch
      %21 = sbr.rel (0) target = $region9
    $region8: #{tpu_custom_call.1} parent=1 // pred_region
      %s23 = ssub.s32 1024, 1024
      %24 = vsyncadd [#allocation6], %s23
      %s26 = sshll.u32 [#allocation5], 4
      %s27 = int_to_ptr.vmem [resolvable:$true] %s26
      %29 = dma.hbm_to_vmem [thread:$0]  %s1, 1024, %s27, [#allocation6]
    $region9: #{tpu_custom_call.1} parent=1 // pred_fallthru
      _
    // Predicated region
    $region10: #{tpu_custom_call.1} parent=1 // pred_check
      _
    $region11: #{tpu_custom_call.1} parent=1 // pred_check_branch
      %31 = sbr.rel (0) target = $region13
    $region12: #{tpu_custom_call.1} parent=1 // pred_region
      %32 = dma.done [#allocation3], 128
    $region13: #{tpu_custom_call.1} parent=1 // pred_fallthru
      _
    // Predicated region
    $region14: #{tpu_custom_call.1} parent=1 // pred_check
      _
    $region15: #{tpu_custom_call.1} parent=1 // pred_check_branch
      %34 = sbr.rel (0) target = $region17
    $region16: #{tpu_custom_call.1} parent=1 // pred_region
      %35 = dma.done [#allocation6], 1024
    $region17: #{tpu_custom_call.1} parent=1 // pred_fallthru
      _
    %v36 = vld [vmem:[#allocation5] sm:$0xff]
    %v37 = vld [vmem:[#allocation5 + $0x8] sm:$0xff]
    %v38 = vld [vmem:[#allocation5 + $0x10] sm:$0xff]
    %v39 = vld [vmem:[#allocation5 + $0x18] sm:$0xff]
    %v40 = vld [vmem:[#allocation5 + $0x20] sm:$0xff]
    %v41 = vld [vmem:[#allocation5 + $0x28] sm:$0xff]
    %v42 = vld [vmem:[#allocation5 + $0x30] sm:$0xff]
    %v43 = vld [vmem:[#allocation5 + $0x38] sm:$0xff]
    %v44 = vld [vmem:[#allocation2] sm:$0xff]
    %vm45 = vcmp.ne.f32.partialorder %v44, 0.0
    %v46 = vsel %vm45, 1, 0
    %v47 = vlaneseq
    %v48 = vshrl.u32 %v47, 7
    %v49 = vsub.s32 0, %v48
    %v50 = vrot.slane %v46, %v49
    %v51 = vlaneseq
    %v52 = vshrl.u32 %v51, 7
    %v53 = vsub.s32 1, %v52
    %v54 = vrot.slane %v46, %v53
    %v55 = vlaneseq
    %v56 = vshrl.u32 %v55, 7
    %v57 = vsub.s32 2, %v56
    %v58 = vrot.slane %v46, %v57
    %v59 = vlaneseq
    %v60 = vshrl.u32 %v59, 7
    %v61 = vsub.s32 3, %v60
    %v62 = vrot.slane %v46, %v61
    %v63 = vlaneseq
    %v64 = vshrl.u32 %v63, 7
    %v65 = vsub.s32 4, %v64
    %v66 = vrot.slane %v46, %v65
    %v67 = vlaneseq
    %v68 = vshrl.u32 %v67, 7
    %v69 = vsub.s32 5, %v68
    %v70 = vrot.slane %v46, %v69
    %v71 = vlaneseq
    %v72 = vshrl.u32 %v71, 7
    %v73 = vsub.s32 6, %v72
    %v74 = vrot.slane %v46, %v73
    %v75 = vlaneseq
    %v76 = vshrl.u32 %v75, 7
    %v77 = vsub.s32 7, %v76
    %v78 = vrot.slane %v46, %v77
    %vm79 = vcmp.eq.s32.totalorder %v50, 1
    %vm80 = vcmp.eq.s32.totalorder %v54, 1
    %vm81 = vcmp.eq.s32.totalorder %v58, 1
    %vm82 = vcmp.eq.s32.totalorder %v62, 1
    %vm83 = vcmp.eq.s32.totalorder %v66, 1
    %vm84 = vcmp.eq.s32.totalorder %v70, 1
    %vm85 = vcmp.eq.s32.totalorder %v74, 1
    %vm86 = vcmp.eq.s32.totalorder %v78, 1
    %v87 = vsel %vm79, %v36, 0.0
    %v88 = vsel %vm80, %v37, 0.0
    %v89 = vsel %vm81, %v38, 0.0
    %v90 = vsel %vm82, %v39, 0.0
    %v91 = vsel %vm83, %v40, 0.0
    %v92 = vsel %vm84, %v41, 0.0
    %v93 = vsel %vm85, %v42, 0.0
    %v94 = vsel %vm86, %v43, 0.0
    %95 = vst [vmem:[#allocation7] sm:$0xff] %v87
    %96 = vst [vmem:[#allocation7 + $0x8] sm:$0xff] %v88
    %97 = vst [vmem:[#allocation7 + $0x10] sm:$0xff] %v89
    %98 = vst [vmem:[#allocation7 + $0x18] sm:$0xff] %v90
    %99 = vst [vmem:[#allocation7 + $0x20] sm:$0xff] %v91
    %100 = vst [vmem:[#allocation7 + $0x28] sm:$0xff] %v92
    %101 = vst [vmem:[#allocation7 + $0x30] sm:$0xff] %v93
    %vm102 = vcmask 31744
    %103 = vst.msk [vmem:[#allocation7 + $0x38] sm:$0xff] %vm102, %v94
    // Predicated region
    $region18: #{tpu_custom_call.1} parent=1 // pred_check
      _
    $region19: #{tpu_custom_call.1} parent=1 // pred_check_branch
      %105 = sbr.rel (0) target = $region21
    $region20: #{tpu_custom_call.1} parent=1 // pred_region
      %s107 = ssub.s32 1024, 1024
      %108 = vsyncadd [#allocation4], %s107
      %s110 = sshll.u32 [#allocation7], 4
      %s111 = int_to_ptr.vmem [resolvable:$true] %s110
      %113 = dma.vmem_to_hbm [thread:$0]  %s111, 1024, %s2, [#allocation4]
    $region21: #{tpu_custom_call.1} parent=1 // pred_fallthru
      _
    // Predicated region
    $region22: #{tpu_custom_call.1} parent=1 // pred_check
      _
    $region23: #{tpu_custom_call.1} parent=1 // pred_check_branch
      %115 = sbr.rel (0) target = $region25
    $region24: #{tpu_custom_call.1} parent=1 // pred_region
      %116 = dma.done [#allocation4], 1024
    $region25: #{tpu_custom_call.1} parent=1 // pred_fallthru
      _
    %117 = vsyncpa [#allocation3], 1
    %118 = vsyncpa [#allocation6], 1
    %119 = vsyncpa [#allocation4], 1

</llo_original>
